<compile_context>
chip_gen: v7x
topology: tpu7x:2x2x1
jax: 0.10.0
libtpu: 0.0.40
codegen_flags: <defaults>
</compile_context>

<pallas_src>
import functools

import jax
import jax.numpy as jnp
from jax.experimental import pallas as pl
from jax.experimental.pallas import tpu as pltpu

LANE = 128
ROW_GROUP = 8 * LANE            # one (8,128) f32 tile worth of elements
DEFAULT_BLOCK_ROWS = 2048       # 2048x128 f32 = 1 MiB per input tile


def _num_tensorcores():
    """2 on multi-TensorCore chips (v7x); 1 on v5e/v6e (single TC)."""
    try:
        kind = jax.devices()[0].device_kind.lower()
    except Exception:
        return 1
    return 2 if ("v7" in kind or "7x" in kind) else 1


def _bce_elementwise(x, t):
    """Per-element loss of the torch module (weight=None), f32 in/out.

    softplus(-x) = max(-x,0) + log(1 + exp(-|x|)) is arithmetically identical
    to the module's max_val + log(exp(-max_val) + exp(-x - max_val)) because
    one of the two exps is always exp(0) = 1; it costs 2 transcendentals per
    element instead of 3.  The module's
        bce = -(t*(x - x*t + sp) + (1-t)*(-(x + sp)))
    folds to
        bce = x*(1-t)^2 + sp*(1-2t)
    (FP reassociation only).
    """
    sp_negx = jnp.maximum(-x, 0.0) + jnp.log(1.0 + jnp.exp(-jnp.abs(x)))
    u = 1.0 - t
    return x * u * u + sp_negx * (u - t)


def _bce_kernel(x_ref, t_ref, out_ref, acc_ref, *, total_rows, block_rows,
                n_inner):
    c = pl.program_id(0)        # per-TensorCore ("parallel") axis
    i = pl.program_id(1)        # streaming reduction axis

    @pl.when(i == 0)
    def _():
        acc_ref[...] = jnp.zeros_like(acc_ref)

    x = x_ref[...].astype(jnp.float32)
    t = t_ref[...].astype(jnp.float32)
    bce = _bce_elementwise(x, t)

    # Row-count-based validity using the *unclamped* tile index, so clamped
    # duplicate tiles contribute 0 and ragged final blocks are trimmed.
    start_row = (c * n_inner + i) * block_rows
    is_full = start_row + block_rows <= total_rows

    @pl.when(is_full)
    def _():
        # Steady-state fast path: no iota / mask work at all.
        acc_ref[...] += jnp.sum(bce, axis=0, keepdims=True)

    @pl.when(jnp.logical_not(is_full))
    def _():
        # Ragged final block or clamped duplicate tile.  Rows past the valid
        # range hold garbage (possibly NaN/Inf) -> where, not multiply.
        row = jax.lax.broadcasted_iota(jnp.int32, (block_rows, LANE), 0)
        masked = jnp.where(row < (total_rows - start_row), bce, 0.0)
        acc_ref[...] += jnp.sum(masked, axis=0, keepdims=True)

    @pl.when(i == pl.num_programs(1) - 1)
    def _():
        out_ref[...] = acc_ref[...].reshape(1, 1, LANE)


def bce_with_logits_loss_manual(input_logits, target, weight=None,
                                reduction="mean",
                                block_rows=DEFAULT_BLOCK_ROWS):
    """Pallas TPU implementation of BCEWithLogitsLossManual (weight=None)."""
    assert weight is None, "module default: weight=None"
    # TODO(synk): reduction='none' (full-shape elementwise output) not
    # implemented; the module default 'mean' (plus 'sum') is covered.
    assert reduction in ("mean", "sum")

    n_elems = int(input_logits.size)
    assert int(target.size) == n_elems

    flat_x = input_logits.reshape(-1)
    flat_t = target.reshape(-1)

    # Stream only the dense, sublane-aligned prefix through the kernel; the
    # < 1024-element tail is summed with plain jnp (no jnp.pad round-trip).
    n_main = (n_elems // ROW_GROUP) * ROW_GROUP
    total = jnp.float32(0.0)

    if n_main > 0:
        if n_main == n_elems:
            x2 = flat_x.reshape(-1, LANE)
            t2 = flat_t.reshape(-1, LANE)
        else:
            x2 = flat_x[:n_main].reshape(-1, LANE)
            t2 = flat_t[:n_main].reshape(-1, LANE)
        rows = n_main // LANE               # multiple of 8 by construction

        if block_rows >= rows:
            block_rows = rows
        else:
            block_rows = max(8, (block_rows // 8) * 8)   # sublane-aligned

        n_blocks = -(-rows // block_rows)
        ncores = min(_num_tensorcores(), n_blocks)       # 1 on v5e/v6e, 2 on v7x
        n_inner = -(-n_blocks // ncores)
        grid = (ncores, n_inner)

        if ncores * n_inner == n_blocks:
            def in_map(c, i):
                return (c * n_inner + i, 0)
        else:
            def in_map(c, i):   # clamp; duplicate tiles are masked to 0 in-kernel
                return (jnp.minimum(c * n_inner + i, n_blocks - 1), 0)

        kernel = functools.partial(
            _bce_kernel, total_rows=int(rows), block_rows=int(block_rows),
            n_inner=int(n_inner))

        partial_sums = pl.pallas_call(
            kernel,
            out_shape=jax.ShapeDtypeStruct((ncores, 1, LANE), jnp.float32),
            grid_spec=pltpu.PrefetchScalarGridSpec(
                num_scalar_prefetch=0,
                grid=grid,
                in_specs=[
                    pl.BlockSpec((block_rows, LANE), in_map),
                    pl.BlockSpec((block_rows, LANE), in_map),
                ],
                out_specs=pl.BlockSpec((1, 1, LANE), lambda c, i: (c, 0, 0)),
                scratch_shapes=[pltpu.VMEM((1, LANE), jnp.float32)],
            ),
            # TODO(synk): on v7x, verify in the profile that the outer axis
            # shards across both TensorCores; if not, switch axis 0 to
            # pltpu.CORE_PARALLEL.
            compiler_params=pltpu.CompilerParams(
                dimension_semantics=("parallel", "arbitrary"),
            ),
        )(x2, t2)
        total = total + jnp.sum(partial_sums)

    if n_main < n_elems:
        xt = flat_x[n_main:].astype(jnp.float32)
        tt = flat_t[n_main:].astype(jnp.float32)
        total = total + jnp.sum(_bce_elementwise(xt, tt))

    if reduction == "mean":
        return total / jnp.float32(n_elems)
    return total


def _reference(input_logits, target, reduction="mean"):
    """Exact transcription of the torch module's forward (for validation)."""
    x = input_logits.astype(jnp.float32)
    t = target.astype(jnp.float32)
    max_val = jnp.maximum(-x, 0.0)
    log_probs = x - x * t + max_val + jnp.log(
        jnp.exp(-max_val) + jnp.exp(-x - max_val))
    bce = -(t * log_probs + (1.0 - t) * jax.nn.log_sigmoid(-x))
    return jnp.mean(bce) if reduction == "mean" else jnp.sum(bce)


if __name__ == "__main__":
    key = jax.random.PRNGKey(0)
    k1, k2 = jax.random.split(key)

    # NCHW-shaped inputs, consistent with a typical conv-net output.
    logits = jax.random.normal(k1, (2, 4, 16, 16), dtype=jnp.float32) * 2.0
    target = jax.random.uniform(k2, (2, 4, 16, 16), dtype=jnp.float32)

    loss = jax.block_until_ready(
        bce_with_logits_loss_manual(logits, target, reduction="mean"))
    ref = jax.block_until_ready(_reference(logits, target, "mean"))
    assert jnp.allclose(loss, ref, rtol=1e-5, atol=1e-5), (loss, ref)

    loss_sum = jax.block_until_ready(
        bce_with_logits_loss_manual(logits, target, reduction="sum"))
    ref_sum = jax.block_until_ready(_reference(logits, target, "sum"))
    assert jnp.allclose(loss_sum, ref_sum, rtol=1e-5, atol=1e-5), (loss_sum, ref_sum)

    # Ragged paths: numel % 1024 != 0 (host tail), rows % block_rows != 0
    # (masked final block) and an odd block count (clamped duplicate tile when
    # 2 TensorCores are used).
    k3, k4 = jax.random.split(k2)
    x_big = jax.random.normal(k3, (3, 5, 37, 23), dtype=jnp.float32) * 3.0
    t_big = jax.random.uniform(k4, (3, 5, 37, 23), dtype=jnp.float32)
    loss2 = jax.block_until_ready(
        bce_with_logits_loss_manual(x_big, t_big, reduction="mean", block_rows=40))
    ref2 = jax.block_until_ready(_reference(x_big, t_big, "mean"))
    assert jnp.allclose(loss2, ref2, rtol=1e-5, atol=1e-5), (loss2, ref2)

    print("KERNEL_OK")
</pallas_src>

<mosaic_0001>
module attributes {stable_mosaic.version = 11 : i64} {
  func.func @_bce_kernel(%arg0: i32, %arg1: i32, %arg2: memref<16x128xf32, #tpu.memory_space<vmem>>, %arg3: memref<16x128xf32, #tpu.memory_space<vmem>>, %arg4: memref<1x1x128xf32, #tpu.memory_space<vmem>>, %arg5: memref<1x128xf32, #tpu.memory_space<vmem>>) attributes {dimension_semantics = [#tpu.dimension_semantics<parallel>, #tpu.dimension_semantics<arbitrary>], iteration_bounds = array<i64: 1, 1>, scalar_prefetch = 0 : i64, scratch_operands = 1 : i64, tpu.core_type = #tpu.core_type<tc>, window_params = [{transform_indices = @transform_0, window_bounds = array<i64: 16, 128>}, {transform_indices = @transform_1, window_bounds = array<i64: 16, 128>}, {transform_indices = @transform_2, window_bounds = array<i64: 1, 1, 128>}]} {
    %c0_i32 = arith.constant 0 : i32
    %0 = arith.cmpi eq, %arg1, %c0_i32 : i32
    %1 = arith.extui %0 : i1 to i32
    %c0_i32_0 = arith.constant 0 : i32
    %2 = arith.cmpi ne, %1, %c0_i32_0 : i32
    scf.if %2 {
      %cst_14 = arith.constant 0.000000e+00 : f32
      %37 = vector.broadcast %cst_14 : f32 to vector<1x128xf32>
      %c0_15 = arith.constant 0 : index
      %c0_16 = arith.constant 0 : index
      %38 = vector.load %arg5[%c0_15, %c0_16] : memref<1x128xf32, #tpu.memory_space<vmem>>, vector<1x128xf32>
      tpu.vector_store %arg5[%c0_15, %c0_16], %37 {strides = array<i32>} : memref<1x128xf32, #tpu.memory_space<vmem>>, vector<1x128xf32>,
    } else {
    }
    %c0 = arith.constant 0 : index
    %c0_1 = arith.constant 0 : index
    %3 = vector.load %arg2[%c0, %c0_1] : memref<16x128xf32, #tpu.memory_space<vmem>>, vector<16x128xf32>
    %c0_2 = arith.constant 0 : index
    %c0_3 = arith.constant 0 : index
    %4 = vector.load %arg3[%c0_2, %c0_3] : memref<16x128xf32, #tpu.memory_space<vmem>>, vector<16x128xf32>
    %cst = arith.constant 0.000000e+00 : f32
    %5 = vector.broadcast %cst : f32 to vector<16x128xf32>
    %6 = arith.subf %5, %3 : vector<16x128xf32>
    %cst_4 = arith.constant 0.000000e+00 : f32
    %7 = vector.broadcast %cst_4 : f32 to vector<16x128xf32>
    %8 = arith.maximumf %6, %7 : vector<16x128xf32>
    %9 = math.absf %3 : vector<16x128xf32>
    %cst_5 = arith.constant 0.000000e+00 : f32
    %10 = vector.broadcast %cst_5 : f32 to vector<16x128xf32>
    %11 = arith.subf %10, %9 : vector<16x128xf32>
    %12 = math.exp %11 : vector<16x128xf32>
    %cst_6 = arith.constant 1.000000e+00 : f32
    %13 = vector.broadcast %cst_6 : f32 to vector<16x128xf32>
    %14 = arith.addf %13, %12 : vector<16x128xf32>
    %15 = math.log %14 : vector<16x128xf32>
    %16 = arith.addf %8, %15 : vector<16x128xf32>
    %cst_7 = arith.constant 1.000000e+00 : f32
    %17 = vector.broadcast %cst_7 : f32 to vector<16x128xf32>
    %18 = arith.subf %17, %4 : vector<16x128xf32>
    %19 = arith.mulf %3, %18 : vector<16x128xf32>
    %20 = arith.mulf %19, %18 : vector<16x128xf32>
    %21 = arith.subf %18, %4 : vector<16x128xf32>
    %22 = arith.mulf %16, %21 : vector<16x128xf32>
    %23 = arith.addf %20, %22 : vector<16x128xf32>
    %c1_i32 = arith.constant 1 : i32
    %24 = arith.muli %arg0, %c1_i32 : i32
    %25 = arith.addi %24, %arg1 : i32
    %c16_i32 = arith.constant 16 : i32
    %26 = arith.muli %25, %c16_i32 : i32
    %c16_i32_8 = arith.constant 16 : i32
    %27 = arith.addi %26, %c16_i32_8 : i32
    %c16_i32_9 = arith.constant 16 : i32
    %28 = arith.cmpi sle, %27, %c16_i32_9 : i32
    %29 = arith.extui %28 : i1 to i32
    %c0_i32_10 = arith.constant 0 : i32
    %30 = arith.cmpi ne, %29, %c0_i32_10 : i32
    scf.if %30 {
      %c0_14 = arith.constant 0 : index
      %c0_15 = arith.constant 0 : index
      %37 = vector.load %arg5[%c0_14, %c0_15] : memref<1x128xf32, #tpu.memory_space<vmem>>, vector<1x128xf32>
      %cst_16 = arith.constant dense<0.000000e+00> : vector<128xf32>
      %38 = vector.multi_reduction <add>, %23, %cst_16 [0] : vector<16x128xf32> to vector<128xf32>
      %39 = vector.shape_cast %38 : vector<128xf32> to vector<1x128xf32>
      %40 = arith.addf %37, %39 : vector<1x128xf32>
      %c0_17 = arith.constant 0 : index
      %c0_18 = arith.constant 0 : index
      %41 = vector.load %arg5[%c0_17, %c0_18] : memref<1x128xf32, #tpu.memory_space<vmem>>, vector<1x128xf32>
      tpu.vector_store %arg5[%c0_17, %c0_18], %40 {strides = array<i32>} : memref<1x128xf32, #tpu.memory_space<vmem>>, vector<1x128xf32>,
    } else {
    }
    %true = arith.constant true
    %31 = arith.xori %28, %true : i1
    %32 = arith.extui %31 : i1 to i32
    %c0_i32_11 = arith.constant 0 : i32
    %33 = arith.cmpi ne, %32, %c0_i32_11 : i32
    scf.if %33 {
      %37 = tpu.iota {dimensions = array<i32: 0>} : vector<16x128xi32>
      %c16_i32_14 = arith.constant 16 : i32
      %38 = arith.subi %c16_i32_14, %26 : i32
      %39 = vector.broadcast %38 : i32 to vector<16x128xi32>
      %40 = arith.cmpi slt, %37, %39 : vector<16x128xi32>
      %cst_15 = arith.constant 0.000000e+00 : f32
      %41 = vector.broadcast %cst_15 : f32 to vector<16x128xf32>
      %42 = arith.select %40, %23, %41 : vector<16x128xi1>, vector<16x128xf32>
      %c0_16 = arith.constant 0 : index
      %c0_17 = arith.constant 0 : index
      %43 = vector.load %arg5[%c0_16, %c0_17] : memref<1x128xf32, #tpu.memory_space<vmem>>, vector<1x128xf32>
      %cst_18 = arith.constant dense<0.000000e+00> : vector<128xf32>
      %44 = vector.multi_reduction <add>, %42, %cst_18 [0] : vector<16x128xf32> to vector<128xf32>
      %45 = vector.shape_cast %44 : vector<128xf32> to vector<1x128xf32>
      %46 = arith.addf %43, %45 : vector<1x128xf32>
      %c0_19 = arith.constant 0 : index
      %c0_20 = arith.constant 0 : index
      %47 = vector.load %arg5[%c0_19, %c0_20] : memref<1x128xf32, #tpu.memory_space<vmem>>, vector<1x128xf32>
      tpu.vector_store %arg5[%c0_19, %c0_20], %46 {strides = array<i32>} : memref<1x128xf32, #tpu.memory_space<vmem>>, vector<1x128xf32>,
    } else {
    }
    %c0_i32_12 = arith.constant 0 : i32
    %34 = arith.cmpi eq, %arg1, %c0_i32_12 : i32
    %35 = arith.extui %34 : i1 to i32
    %c0_i32_13 = arith.constant 0 : i32
    %36 = arith.cmpi ne, %35, %c0_i32_13 : i32
    scf.if %36 {
      %c0_14 = arith.constant 0 : index
      %c0_15 = arith.constant 0 : index
      %37 = vector.load %arg5[%c0_14, %c0_15] : memref<1x128xf32, #tpu.memory_space<vmem>>, vector<1x128xf32>
      %38 = vector.shape_cast %37 : vector<1x128xf32> to vector<1x1x128xf32>
      %c0_16 = arith.constant 0 : index
      %c0_17 = arith.constant 0 : index
      %c0_18 = arith.constant 0 : index
      %39 = vector.load %arg4[%c0_16, %c0_17, %c0_18] : memref<1x1x128xf32, #tpu.memory_space<vmem>>, vector<1x1x128xf32>
      tpu.vector_store %arg4[%c0_16, %c0_17, %c0_18], %38 {strides = array<i32>} : memref<1x1x128xf32, #tpu.memory_space<vmem>>, vector<1x1x128xf32>,
    } else {
    }
    return
  }
  func.func @transform_0(%arg0: i32, %arg1: i32) -> (i32, i32) {
    %c1_i32 = arith.constant 1 : i32
    %0 = arith.muli %arg0, %c1_i32 : i32
    %1 = arith.addi %0, %arg1 : i32
    %c0_i32 = arith.constant 0 : i32
    %c0_i32_0 = arith.constant 0 : i32
    return %1, %c0_i32 : i32, i32
  }
  func.func @transform_1(%arg0: i32, %arg1: i32) -> (i32, i32) {
    %c1_i32 = arith.constant 1 : i32
    %0 = arith.muli %arg0, %c1_i32 : i32
    %1 = arith.addi %0, %arg1 : i32
    %c0_i32 = arith.constant 0 : i32
    %c0_i32_0 = arith.constant 0 : i32
    return %1, %c0_i32 : i32, i32
  }
  func.func @transform_2(%arg0: i32, %arg1: i32) -> (i32, i32, i32) {
    %c0_i32 = arith.constant 0 : i32
    %c0_i32_0 = arith.constant 0 : i32
    %c0_i32_1 = arith.constant 0 : i32
    return %arg0, %c0_i32, %c0_i32_0 : i32, i32, i32
  }
}

</mosaic_0001>

<llo_original>
// kernel: tpu_custom_call.1
$region0: #{tpu_custom_call.1}
  #allocation0 [shape = 'u32[]', space=smem, size = 0x4, offset = 0x4, fixed_abs, tag = 'smem constant byte address 0x4 - core index']
  #allocation1 [shape = 'u32[144,128]{1,0:T(1,128)}', space=vmem, size = 0x12000, scoped, tag = 'internal scratch']
  #allocation2 [shape = 'f32[1,128]{1,0:T(1,128)}', space=vmem, size = 0x200, scoped, tag = 'scratch operand']
  %s0 = inlined_call_operand.hbm [shape: f32[16,128], index: 0, kind: input, shape index: {}]
  %s1 = inlined_call_operand.hbm [shape: f32[16,128], index: 1, kind: input, shape index: {}]
  %s2 = inlined_call_operand.hbm [shape: f32[1,1,128], index: 2, kind: output, shape index: {}]
  %s3 = sld [smem:[#allocation0]]
  $region42: #{tpu_custom_call.1} parent=0
    _
  %s5 = ssub.s32 1, %s3
  %s6 = scalar_select 0, %s5, %s3
  $region1: #{tpu_custom_call.1} parent=0
    #allocation3 [shape = 'u8[8192]{0}', space=vmem, size = 0x2000, scoped, tag = 'input window, operand 0, single buffered']
    #allocation4 [shape = 's32[1]{0}', space=sflag, size = 0x4, scoped, tag = 'scoped memory for tpu_custom_call.1']
    #allocation5 [shape = 's32[1]{0}', space=sflag, size = 0x4, scoped, tag = 'scoped memory for tpu_custom_call.1']
    #allocation6 [shape = 'u8[8192]{0}', space=vmem, size = 0x2000, scoped, tag = 'input window, operand 1, single buffered']
    #allocation7 [shape = 's32[1]{0}', space=sflag, size = 0x4, scoped, tag = 'scoped memory for tpu_custom_call.1']
    #allocation8 [shape = 'u8[512]{0}', space=vmem, size = 0x400, scoped, tag = 'output window, operand 0, single buffered']
    %7 = vsyncpa [#allocation4], 0
    %8 = vsyncpa [#allocation7], 0
    %9 = vsyncpa [#allocation5], 0
    // Predicated region
    $region2: #{tpu_custom_call.1} parent=1 // pred_check
      _
    $region3: #{tpu_custom_call.1} parent=1 // pred_check_branch
      %11 = sbr.rel (0) target = $region5
    $region4: #{tpu_custom_call.1} parent=1 // pred_region
      %s12 = sadd.s32 0, 0
      %s13 = smul.u32 2, %s12
      %s15 = ssub.s32 256, 256
      %16 = vsyncadd [#allocation4], %s15
      %s17 = smul.addr %s13, 128
      %s18 = scalar_lea.hbm %s0, %s17
      %s19 = sshll.u32 [#allocation3], 4
      %s20 = int_to_ptr.vmem [resolvable:$true] %s19
      %25 = dma.hbm_to_vmem [thread:$0]  %s18, 256, %s20, [#allocation4], 128, 128, 8
    $region5: #{tpu_custom_call.1} parent=1 // pred_fallthru
      _
    // Predicated region
    $region6: #{tpu_custom_call.1} parent=1 // pred_check
      _
    $region7: #{tpu_custom_call.1} parent=1 // pred_check_branch
      %27 = sbr.rel (0) target = $region9
    $region8: #{tpu_custom_call.1} parent=1 // pred_region
      %s28 = sadd.s32 0, 0
      %s29 = smul.u32 2, %s28
      %s31 = ssub.s32 256, 256
      %32 = vsyncadd [#allocation7], %s31
      %s33 = smul.addr %s29, 128
      %s34 = scalar_lea.hbm %s1, %s33
      %s35 = sshll.u32 [#allocation6], 4
      %s36 = int_to_ptr.vmem [resolvable:$true] %s35
      %41 = dma.hbm_to_vmem [thread:$0]  %s34, 256, %s36, [#allocation7], 128, 128, 8
    $region9: #{tpu_custom_call.1} parent=1 // pred_fallthru
      _
    // Predicated region
    $region10: #{tpu_custom_call.1} parent=1 // pred_check
      _
    $region11: #{tpu_custom_call.1} parent=1 // pred_check_branch
      %43 = sbr.rel (0) target = $region13
    $region12: #{tpu_custom_call.1} parent=1 // pred_region
      %44 = dma.done [#allocation4], 256
    $region13: #{tpu_custom_call.1} parent=1 // pred_fallthru
      _
    // Predicated region
    $region14: #{tpu_custom_call.1} parent=1 // pred_check
      _
    $region15: #{tpu_custom_call.1} parent=1 // pred_check_branch
      %46 = sbr.rel (0) target = $region17
    $region16: #{tpu_custom_call.1} parent=1 // pred_region
      %47 = dma.done [#allocation7], 256
    $region17: #{tpu_custom_call.1} parent=1 // pred_fallthru
      _
    %s48 = sadd.s32 0, 0
    %s49 = smul.u32 2, %s48
    %s50 = sadd.s32 0, 0
    %s51 = smul.u32 2, %s50
    %p52 = scmp.eq.s32.totalorder 0, 0
    // Predicated region
    $region18: #{tpu_custom_call.1} parent=1 // pred_check
      %p53 = pneg %p52
    $region19: #{tpu_custom_call.1} parent=1 // pred_check_branch
      %55 = sbr.rel (%p53) target = $region21
    $region20: #{tpu_custom_call.1} parent=1 // pred_region
      %56 = vst [vmem:[#allocation2] sm:$0x1] 0.0
    $region21: #{tpu_custom_call.1} parent=1 // pred_fallthru
      _
    %v57 = vld [vmem:[#allocation3] sm:$0xff]
    %v58 = vld [vmem:[#allocation3 + $0x8] sm:$0xff]
    %v59 = vld [vmem:[#allocation6] sm:$0xff]
    %v60 = vld [vmem:[#allocation6 + $0x8] sm:$0xff]
    %v61 = vsub.f32 0.0, %v57
    %v62 = vsub.f32 0.0, %v58
    %v63 = vmax.f32 %v61, 0.0
    %v64 = vmax.f32 %v62, 0.0
    %v65 = vand.u32 2147483647, %v57
    %v66 = vand.u32 2147483647, %v58
    %v67 = vsub.f32 0.0, %v65
    %v68 = vsub.f32 0.0, %v66
    %v69 = vmul.f32 %v67, 1.442695
    %v70 = vpow.pop %v69
    %v71 = vmul.f32 %v68, 1.442695
    %v72 = vpow.pop %v71
    %v73 = vadd.f32 %v70, 1.0
    %v74 = vadd.f32 %v72, 1.0
    %v75 = vlog2.pop %v73
    %v76 = vmul.f32 %v75, 0.6931472
    %v77 = vlog2.pop %v74
    %v78 = vmul.f32 %v77, 0.6931472
    %v79 = vadd.f32 %v63, %v76
    %v80 = vadd.f32 %v64, %v78
    %v81 = vsub.f32 1.0, %v59
    %v82 = vsub.f32 1.0, %v60
    %v83 = vmul.f32 %v57, %v81
    %v84 = vmul.f32 %v58, %v82
    %v85 = vmul.f32 %v83, %v81
    %v86 = vmul.f32 %v84, %v82
    %v87 = vsub.f32 %v81, %v59
    %v88 = vsub.f32 %v82, %v60
    %v89 = vmul.f32 %v79, %v87
    %v90 = vmul.f32 %v80, %v88
    %v91 = vadd.f32 %v85, %v89
    %v92 = vadd.f32 %v86, %v90
    %s93 = sadd.s32 0, 0
    %s94 = smul.u32 %s93, 16
    %s95 = sadd.s32 %s94, 16
    %p96 = scmp.le.s32.totalorder %s95, 16
    // Predicated region
    $region22: #{tpu_custom_call.1} parent=1 // pred_check
      %p97 = pneg %p96
    $region23: #{tpu_custom_call.1} parent=1 // pred_check_branch
      %99 = sbr.rel (%p97) target = $region25
    $region24: #{tpu_custom_call.1} parent=1 // pred_region
      %v100 = vld [vmem:[#allocation2] sm:$0x1]
      %v101 = vadd.f32 %v91, %v92
      %v102 = vrot.slane %v101, 4
      %v103 = vadd.f32 %v101, %v102
      %v104 = vrot.slane %v103, 2
      %v105 = vadd.f32 %v103, %v104
      %v106 = vrot.slane %v105, 1
      %v107 = vadd.f32 %v105, %v106
      %v108 = vadd.f32 %v100, %v107
      %109 = vst [vmem:[#allocation2] sm:$0x1] %v108
    $region25: #{tpu_custom_call.1} parent=1 // pred_fallthru
      _
    %p110 = scmp.gt.s32.totalorder %s95, 16
    // Predicated region
    $region26: #{tpu_custom_call.1} parent=1 // pred_check
      %p111 = pneg %p110
    $region27: #{tpu_custom_call.1} parent=1 // pred_check_branch
      %113 = sbr.rel (%p111) target = $region29
    $region28: #{tpu_custom_call.1} parent=1 // pred_region
      %v114 = vlaneseq
      %v115 = vshrl.u32 %v114, 7
      %v116 = vadd.s32 %v115, 8
      %s117 = ssub.s32 16, %s94
      %v118 = vstv %s117
      %vm119 = vcmp.lt.s32.totalorder %v115, %v118
      %vm120 = vcmp.lt.s32.totalorder %v116, %v118
      %v121 = vsel %vm119, %v91, 0.0
      %v122 = vsel %vm120, %v92, 0.0
      %v123 = vld [vmem:[#allocation2] sm:$0x1]
      %v124 = vadd.f32 %v121, %v122
      %v125 = vrot.slane %v124, 4
      %v126 = vadd.f32 %v124, %v125
      %v127 = vrot.slane %v126, 2
      %v128 = vadd.f32 %v126, %v127
      %v129 = vrot.slane %v128, 1
      %v130 = vadd.f32 %v128, %v129
      %v131 = vadd.f32 %v123, %v130
      %132 = vst [vmem:[#allocation2] sm:$0x1] %v131
    $region29: #{tpu_custom_call.1} parent=1 // pred_fallthru
      _
    // Predicated region
    $region30: #{tpu_custom_call.1} parent=1 // pred_check
      %p133 = pneg %p52
    $region31: #{tpu_custom_call.1} parent=1 // pred_check_branch
      %135 = sbr.rel (%p133) target = $region33
    $region32: #{tpu_custom_call.1} parent=1 // pred_region
      %v136 = vld [vmem:[#allocation2] sm:$0x1]
      %137 = vst [vmem:[#allocation8] sm:$0x1] %v136
    $region33: #{tpu_custom_call.1} parent=1 // pred_fallthru
      _
    // Predicated region
    $region34: #{tpu_custom_call.1} parent=1 // pred_check
      _
    $region35: #{tpu_custom_call.1} parent=1 // pred_check_branch
      %139 = sbr.rel (0) target = $region37
    $region36: #{tpu_custom_call.1} parent=1 // pred_region
      %s141 = ssub.s32 16, 16
      %142 = vsyncadd [#allocation5], %s141
      %s144 = sshll.u32 [#allocation8], 4
      %s145 = int_to_ptr.vmem [resolvable:$true] %s144
      %147 = dma.vmem_to_hbm [thread:$0]  %s145, 16, %s2, [#allocation5]
    $region37: #{tpu_custom_call.1} parent=1 // pred_fallthru
      _
    // Predicated region
    $region38: #{tpu_custom_call.1} parent=1 // pred_check
      _
    $region39: #{tpu_custom_call.1} parent=1 // pred_check_branch
      %149 = sbr.rel (0) target = $region41
    $region40: #{tpu_custom_call.1} parent=1 // pred_region
      %150 = dma.done [#allocation5], 16
    $region41: #{tpu_custom_call.1} parent=1 // pred_fallthru
      _
    %151 = vsyncpa [#allocation4], 1
    %152 = vsyncpa [#allocation7], 1
    %153 = vsyncpa [#allocation5], 1

</llo_original>
